<compile_context>
chip_gen: v5e
topology: v5e:2x2
jax: 0.10.0
libtpu: 0.0.40
codegen_flags: <defaults>
</compile_context>

<pallas_src>
import functools

import numpy as np
import jax
import jax.numpy as jnp
from jax import lax
from jax.experimental import pallas as pl
from jax.experimental.pallas import tpu as pltpu


# --------------------------------------------------------------------------- #
# Host-side (numpy) constant construction
# --------------------------------------------------------------------------- #
def _bilinear_matrix_np(out_size: int, in_size: int) -> np.ndarray:
    """(out_size, in_size) row-stochastic bilinear interpolation matrix."""
    scale = in_size / out_size
    dst = np.arange(out_size, dtype=np.float64)
    src = np.clip((dst + 0.5) * scale - 0.5, 0.0, float(in_size - 1))
    lo = np.floor(src).astype(np.int64)
    hi = np.minimum(lo + 1, in_size - 1)
    frac = (src - lo).astype(np.float32)
    w = np.zeros((out_size, in_size), np.float32)
    rows = np.arange(out_size)
    np.add.at(w, (rows, lo), (1.0 - frac))
    np.add.at(w, (rows, hi), frac)
    return w


def _geometry(img_size_t, height, width):
    """Mirrors the PyTorch/PIL aspect-ratio branch exactly (static Python)."""
    img_w, img_h = int(img_size_t[0]), int(img_size_t[1])
    ratio_w = img_w / width
    ratio_h = img_h / height
    if ratio_w >= ratio_h:
        new_w, new_h = int(ratio_h * width), img_h
        left, top = (img_w - new_w) // 2, 0
    else:
        new_h, new_w = int(ratio_w * height), img_w
        top, left = (img_h - new_h) // 2, 0
    return img_w, img_h, new_w, new_h, left, top


def _pad_tuple(pad_value, c_dim):
    if np.isscalar(pad_value):
        return (float(pad_value),) * c_dim
    pad_t = tuple(float(v) for v in pad_value)
    assert len(pad_t) == c_dim, (len(pad_t), c_dim)
    return pad_t


def _img_size_tuple(img_size):
    if isinstance(img_size, int):
        return (img_size, img_size)
    return tuple(int(v) for v in img_size)


# --------------------------------------------------------------------------- #
# Kernel
# --------------------------------------------------------------------------- #
def _resize_pad_kernel(x_ref, whb_ref, wwt_ref, pad_ref, o_ref):
    # x_ref   : (C*H, W)            one image, channels stacked along rows
    # wwt_ref : (W, img_w)          Ww^T with `left` column placement baked in
    # whb_ref : (C*img_h, C*H)      block-diagonal Wh with `top` rows baked in
    # pad_ref : (C*img_h, img_w)    pad value outside paste region, 0 inside
    # o_ref   : (C*img_h, img_w)
    tmp = jnp.dot(x_ref[...], wwt_ref[...],
                  preferred_element_type=jnp.float32)          # (C*H, img_w)
    placed = jnp.dot(whb_ref[...], tmp,
                     preferred_element_type=jnp.float32)       # (C*img_h, img_w)
    # Outside the paste rectangle `placed` is exactly 0.0 (zero rows/cols baked
    # into the matrices), so padding is a single add + one full-block store.
    o_ref[...] = placed + pad_ref[...]


# --------------------------------------------------------------------------- #
# Cached builder: constants + pallas_call, keyed on static geometry
# --------------------------------------------------------------------------- #
@functools.lru_cache(maxsize=None)
def _make_resize_pad(batch, c_dim, height, width, img_size_t, pad_t):
    img_w, img_h, new_w, new_h, left, top = _geometry(img_size_t, height, width)
    pad_np = np.asarray(pad_t, np.float32)

    wh = _bilinear_matrix_np(new_h, height)            # (new_h, H)
    ww = _bilinear_matrix_np(new_w, width)             # (new_w, W)

    # Block-diagonal height-resize with row placement baked in.
    wh_block = np.zeros((c_dim * img_h, c_dim * height), np.float32)
    for c in range(c_dim):
        wh_block[c * img_h + top: c * img_h + top + new_h,
                 c * height: (c + 1) * height] = wh

    # Pre-transposed width-resize with column placement baked in.
    wwt = np.zeros((width, img_w), np.float32)
    wwt[:, left:left + new_w] = ww.T

    # Additive pad canvas: pad value outside the paste rectangle, 0 inside.
    pad_canvas = np.tile(pad_np[:, None, None], (1, img_h, img_w)).astype(np.float32)
    pad_canvas[:, top:top + new_h, left:left + new_w] = 0.0
    pad_canvas = pad_canvas.reshape(c_dim * img_h, img_w)

    whb_dev = jnp.asarray(wh_block)
    wwt_dev = jnp.asarray(wwt)
    pad_dev = jnp.asarray(pad_canvas)

    call = pl.pallas_call(
        _resize_pad_kernel,
        out_shape=jax.ShapeDtypeStruct((batch, c_dim * img_h, img_w), jnp.float32),
        grid=(batch,),
        in_specs=[
            pl.BlockSpec((None, c_dim * height, width), lambda b: (b, 0, 0)),   # image b
            pl.BlockSpec((c_dim * img_h, c_dim * height), lambda b: (0, 0)),    # Wh_block
            pl.BlockSpec((width, img_w), lambda b: (0, 0)),                     # Ww^T
            pl.BlockSpec((c_dim * img_h, img_w), lambda b: (0, 0)),             # pad canvas
        ],
        out_specs=pl.BlockSpec((None, c_dim * img_h, img_w), lambda b: (b, 0, 0)),
        compiler_params=pltpu.CompilerParams(
            dimension_semantics=("parallel",)),                 # 2x on v7x (2 TCs)
    )

    @jax.jit
    def run(x):                                   # x: (B, C, H, W) f32
        x_rows = x.reshape(batch, c_dim * height, width)        # free layout plumbing
        out = call(x_rows, whb_dev, wwt_dev, pad_dev)
        return out.reshape(batch, c_dim, img_h, img_w)

    return run


def resize_pad(x: jnp.ndarray, img_size, pad_value) -> jnp.ndarray:
    """x: (C, H, W) or (B, C, H, W) float32 -> same rank with (img_h, img_w) canvas."""
    squeeze = (x.ndim == 3)
    if squeeze:
        x = x[None]
    batch, c_dim, height, width = x.shape
    img_size_t = _img_size_tuple(img_size)
    pad_t = _pad_tuple(pad_value, c_dim)
    run = _make_resize_pad(batch, c_dim, height, width, img_size_t, pad_t)
    out = run(x.astype(jnp.float32))
    return out[0] if squeeze else out


# --------------------------------------------------------------------------- #
# Pure-JAX reference (same bilinear matrices, same contraction order)
# --------------------------------------------------------------------------- #
def resize_pad_ref(x, img_size, pad_value):
    squeeze = (x.ndim == 3)
    if squeeze:
        x = x[None]
    batch, c_dim, height, width = x.shape
    img_size_t = _img_size_tuple(img_size)
    img_w, img_h, new_w, new_h, left, top = _geometry(img_size_t, height, width)
    pad_np = np.asarray(_pad_tuple(pad_value, c_dim), np.float32)
    wh = jnp.asarray(_bilinear_matrix_np(new_h, height))
    ww = jnp.asarray(_bilinear_matrix_np(new_w, width))
    tmp = jnp.einsum("bchw,wp->bchp", x, ww.T,
                     precision=lax.Precision.HIGHEST)           # width first
    resized = jnp.einsum("oh,bchp->bcop", wh, tmp,
                         precision=lax.Precision.HIGHEST)
    canvas = jnp.broadcast_to(jnp.asarray(pad_np)[None, :, None, None],
                              (batch, c_dim, img_h, img_w))
    out = lax.dynamic_update_slice(canvas, resized, (0, 0, top, left))
    return out[0] if squeeze else out


if __name__ == "__main__":
    key = jax.random.PRNGKey(0)
    # Batch of 2 images: 3 channels, height=16, width=24 (PIL size = (24, 16)).
    x = jax.random.uniform(key, (2, 3, 16, 24), jnp.float32, minval=0.0, maxval=255.0)
    img_size = [32, 32]            # (img_w, img_h)
    pad_value = [10.0, 20.0, 30.0]

    out = jax.block_until_ready(resize_pad(x, img_size, pad_value))
    ref = resize_pad_ref(x, img_size, pad_value)
    assert out.shape == (2, 3, 32, 32), out.shape
    assert jnp.allclose(out, ref, atol=5e-3, rtol=1e-5), \
        f"mismatch vs reference: max abs diff {jnp.max(jnp.abs(out - ref))}"
    print("KERNEL_OK")
</pallas_src>

<mosaic_0001>
module attributes {stable_mosaic.version = 11 : i64} {
  func.func @_resize_pad_kernel(%arg0: i32, %arg1: memref<1x48x24xf32, #tpu.memory_space<vmem>>, %arg2: memref<96x48xf32, #tpu.memory_space<vmem>>, %arg3: memref<24x32xf32, #tpu.memory_space<vmem>>, %arg4: memref<96x32xf32, #tpu.memory_space<vmem>>, %arg5: memref<1x96x32xf32, #tpu.memory_space<vmem>>) attributes {dimension_semantics = [#tpu.dimension_semantics<parallel>], iteration_bounds = array<i64: 2>, scalar_prefetch = 0 : i64, scratch_operands = 0 : i64, tpu.core_type = #tpu.core_type<tc>, window_params = [{transform_indices = @transform_0, window_bounds = array<i64: 1, 48, 24>}, {pipeline_mode = #tpu.pipeline_mode<synchronous>, transform_indices = @transform_1, window_bounds = array<i64: 96, 48>}, {pipeline_mode = #tpu.pipeline_mode<synchronous>, transform_indices = @transform_2, window_bounds = array<i64: 24, 32>}, {pipeline_mode = #tpu.pipeline_mode<synchronous>, transform_indices = @transform_3, window_bounds = array<i64: 96, 32>}, {transform_indices = @transform_4, window_bounds = array<i64: 1, 96, 32>}]} {
    %c0 = arith.constant 0 : index
    %c0_0 = arith.constant 0 : index
    %c0_1 = arith.constant 0 : index
    %0 = vector.load %arg1[%c0, %c0_0, %c0_1] : memref<1x48x24xf32, #tpu.memory_space<vmem>>, vector<1x48x24xf32>
    %1 = vector.shape_cast %0 : vector<1x48x24xf32> to vector<48x24xf32>
    %c0_2 = arith.constant 0 : index
    %c0_3 = arith.constant 0 : index
    %2 = vector.load %arg3[%c0_2, %c0_3] : memref<24x32xf32, #tpu.memory_space<vmem>>, vector<24x32xf32>
    %cst = arith.constant dense<0.000000e+00> : vector<48x32xf32>
    %3 = tpu.matmul %1, %2, %cst {dimension_numbers = #tpu.dot_dimension_numbers<[1], [0], [0], [1], [0, 0, 1, 1], [], []>} : vector<48x24xf32>, vector<24x32xf32>, vector<48x32xf32> -> vector<48x32xf32>
    %c0_4 = arith.constant 0 : index
    %c0_5 = arith.constant 0 : index
    %4 = vector.load %arg2[%c0_4, %c0_5] : memref<96x48xf32, #tpu.memory_space<vmem>>, vector<96x48xf32>
    %cst_6 = arith.constant dense<0.000000e+00> : vector<96x32xf32>
    %5 = tpu.matmul %4, %3, %cst_6 {dimension_numbers = #tpu.dot_dimension_numbers<[1], [0], [0], [1], [0, 0, 1, 1], [], []>} : vector<96x48xf32>, vector<48x32xf32>, vector<96x32xf32> -> vector<96x32xf32>
    %c0_7 = arith.constant 0 : index
    %c0_8 = arith.constant 0 : index
    %6 = vector.load %arg4[%c0_7, %c0_8] : memref<96x32xf32, #tpu.memory_space<vmem>>, vector<96x32xf32>
    %7 = arith.addf %5, %6 : vector<96x32xf32>
    %c0_9 = arith.constant 0 : index
    %c0_10 = arith.constant 0 : index
    %c0_11 = arith.constant 0 : index
    %8 = vector.load %arg5[%c0_9, %c0_10, %c0_11] : memref<1x96x32xf32, #tpu.memory_space<vmem>>, vector<1x96x32xf32>
    %9 = vector.shape_cast %8 : vector<1x96x32xf32> to vector<96x32xf32>
    %10 = vector.shape_cast %7 : vector<96x32xf32> to vector<1x96x32xf32>
    tpu.vector_store %arg5[%c0_9, %c0_10, %c0_11], %10 {strides = array<i32>} : memref<1x96x32xf32, #tpu.memory_space<vmem>>, vector<1x96x32xf32>,
    return
  }
  func.func @transform_0(%arg0: i32) -> (i32, i32, i32) {
    %c0_i32 = arith.constant 0 : i32
    %c0_i32_0 = arith.constant 0 : i32
    %c0_i32_1 = arith.constant 0 : i32
    return %arg0, %c0_i32, %c0_i32_0 : i32, i32, i32
  }
  func.func @transform_1(%arg0: i32) -> (i32, i32) {
    %c0_i32 = arith.constant 0 : i32
    %c0_i32_0 = arith.constant 0 : i32
    %c0_i32_1 = arith.constant 0 : i32
    return %c0_i32, %c0_i32_0 : i32, i32
  }
  func.func @transform_2(%arg0: i32) -> (i32, i32) {
    %c0_i32 = arith.constant 0 : i32
    %c0_i32_0 = arith.constant 0 : i32
    %c0_i32_1 = arith.constant 0 : i32
    return %c0_i32, %c0_i32_0 : i32, i32
  }
  func.func @transform_3(%arg0: i32) -> (i32, i32) {
    %c0_i32 = arith.constant 0 : i32
    %c0_i32_0 = arith.constant 0 : i32
    %c0_i32_1 = arith.constant 0 : i32
    return %c0_i32, %c0_i32_0 : i32, i32
  }
  func.func @transform_4(%arg0: i32) -> (i32, i32, i32) {
    %c0_i32 = arith.constant 0 : i32
    %c0_i32_0 = arith.constant 0 : i32
    %c0_i32_1 = arith.constant 0 : i32
    return %arg0, %c0_i32, %c0_i32_0 : i32, i32, i32
  }
}

</mosaic_0001>

<llo_original>
// kernel: run.1
$region0: #{run.1}
  #allocation0 [shape = 'u32[]', space=smem, size = 0x4, offset = 0x4, fixed_abs, tag = 'smem constant byte address 0x4 - core index']
  #allocation1 [shape = 'u32[72,128]{1,0:T(1,128)}', space=vmem, size = 0x9000, scoped, tag = 'internal scratch']
  %s0 = inlined_call_operand.hbm [shape: f32[2,48,24], index: 0, kind: input, shape index: {}]
  %s1 = inlined_call_operand.hbm [shape: f32[96,48], index: 1, kind: input, shape index: {}]
  %s2 = inlined_call_operand.hbm [shape: f32[24,32], index: 2, kind: input, shape index: {}]
  %s3 = inlined_call_operand.hbm [shape: f32[96,32], index: 3, kind: input, shape index: {}]
  %s4 = inlined_call_operand.hbm [shape: f32[2,96,32], index: 4, kind: output, shape index: {}]
  %s5 = sld [smem:[#allocation0]]
  $region65: #{run.1} parent=0
    _
  %s7 = ssub.s32 1, %s5
  %s8 = scalar_select 0, %s7, %s5
  $region1: #{run.1} parent=0
    #allocation2 [shape = 'u8[49152]{0}', space=vmem, size = 0xc000, scoped, tag = 'input window, operand 0']
    #allocation3 [shape = 's32[2]{0}', space=sflag, size = 0x8, scoped, tag = 'scoped memory for run.1']
    #allocation4 [shape = 's32[2]{0}', space=sflag, size = 0x8, scoped, tag = 'scoped memory for run.1']
    #allocation5 [shape = 'u8[49152]{0}', space=vmem, size = 0xc000, scoped, tag = 'input window, operand 1, single buffered']
    #allocation6 [shape = 's32[1]{0}', space=sflag, size = 0x4, scoped, tag = 'scoped memory for run.1']
    #allocation7 [shape = 'u8[12288]{0}', space=vmem, size = 0x3000, scoped, tag = 'input window, operand 2, single buffered']
    #allocation8 [shape = 'u8[49152]{0}', space=vmem, size = 0xc000, scoped, tag = 'input window, operand 3, single buffered']
    #allocation9 [shape = 's32[1]{0}', space=sflag, size = 0x4, scoped, tag = 'scoped memory for run.1']
    #allocation10 [shape = 'u8[98304]{0}', space=vmem, size = 0x18000, scoped, tag = 'output window, operand 0']
    %9 = vsyncpa [#allocation3], 0
    %s10 = scalar_lea.sflag [#allocation3], 1
    %11 = vsyncpa %s10, 0
    %12 = vsyncpa [#allocation6], 0
    %13 = vsyncpa [#allocation9], 0
    %14 = vsyncpa [#allocation4], 0
    %s15 = scalar_lea.sflag [#allocation4], 1
    %16 = vsyncpa %s15, 0
    loop: start=0, step=1, limit=4
    $region2: #{run.1} parent=1 // loop_pre_header
      _
    $region3: #{run.1} parent=1 // loop_header
      %s18 = sphi 0, %s22
      %p19 = scmp.ge.s32.totalorder %s18, 4
      %s28 = sphi 0, %s30
      %s31 = sphi 0, %s28
      %s32 = sphi 0, %s31
      %s48 = sphi 0, %s32
      %s52 = sphi 0, %s52
      %s54 = sphi 0, %s52
      %s55 = sphi 0, %s54
      %s69 = sphi 0, %s55
      %s73 = sphi 0, %s73
      %s75 = sphi 0, %s73
      %s76 = sphi 0, %s75
      %s90 = sphi 0, %s76
      %s94 = sphi 0, %s94
      %s96 = sphi 0, %s94
      %s97 = sphi 0, %s96
      %s111 = sphi 0, %s97
      %s117 = sphi 0, %s119
      %s120 = sphi 0, %s117
      %s121 = sphi 0, %s120
      %s137 = sphi 0, %s121
    $region4: #{run.1} parent=1 // loop_header_branch
      %21 = sbr.rel (%p19) target = $region8
    $region5: #{run.1} parent=1 // loop_body
      %s23 = ssub.s32 %s18, 1
      %s24 = ssub.s32 %s18, 2
      %s25 = sadd.s32 %s18, 1
      %s26 = ssub.s32 %s18, %s25
      %p27 = scmp.eq.s32.totalorder %s26, 0
      %s29 = sadd.s32 %s28, 1
      %s30 = scalar_select %p27, %s28, %s29
      %p33 = pneg %p27
      %p34 = scmp.eq.s32.totalorder %s18, 1
      %p35 = por %p33, %p34
      %p36 = scmp.ne.s32.totalorder %s28, %s31
      %p37 = scmp.eq.s32.totalorder %s18, 0
      %p38 = por %p36, %p37
      %p39 = scmp.ne.s32.totalorder %s28, %s31
      %p40 = scmp.eq.s32.totalorder %s23, 1
      %p41 = por %p39, %p40
      %p42 = scmp.ne.s32.totalorder %s31, %s32
      %p43 = scmp.eq.s32.totalorder %s23, 0
      %p44 = por %p42, %p43
      %p45 = scmp.ne.s32.totalorder %s31, %s32
      %p46 = scmp.eq.s32.totalorder %s24, 1
      %p47 = por %p45, %p46
      %p49 = scmp.ne.s32.totalorder %s32, %s48
      %p50 = scmp.eq.s32.totalorder %s24, 0
      %p51 = por %p49, %p50
      %s53 = sadd.s32 %s52, 1
      %p56 = scmp.eq.s32.totalorder %s18, 1
      %p57 = scmp.ne.s32.totalorder %s52, %s54
      %p58 = scmp.eq.s32.totalorder %s18, 0
      %p59 = por %p57, %p58
      %p60 = scmp.ne.s32.totalorder %s52, %s54
      %p61 = scmp.eq.s32.totalorder %s23, 1
      %p62 = por %p60, %p61
      %p63 = scmp.ne.s32.totalorder %s54, %s55
      %p64 = scmp.eq.s32.totalorder %s23, 0
      %p65 = por %p63, %p64
      %p66 = scmp.ne.s32.totalorder %s54, %s55
      %p67 = scmp.eq.s32.totalorder %s24, 1
      %p68 = por %p66, %p67
      %p70 = scmp.ne.s32.totalorder %s55, %s69
      %p71 = scmp.eq.s32.totalorder %s24, 0
      %p72 = por %p70, %p71
      %s74 = sadd.s32 %s73, 1
      %p77 = scmp.eq.s32.totalorder %s18, 1
      %p78 = scmp.ne.s32.totalorder %s73, %s75
      %p79 = scmp.eq.s32.totalorder %s18, 0
      %p80 = por %p78, %p79
      %p81 = scmp.ne.s32.totalorder %s73, %s75
      %p82 = scmp.eq.s32.totalorder %s23, 1
      %p83 = por %p81, %p82
      %p84 = scmp.ne.s32.totalorder %s75, %s76
      %p85 = scmp.eq.s32.totalorder %s23, 0
      %p86 = por %p84, %p85
      %p87 = scmp.ne.s32.totalorder %s75, %s76
      %p88 = scmp.eq.s32.totalorder %s24, 1
      %p89 = por %p87, %p88
      %p91 = scmp.ne.s32.totalorder %s76, %s90
      %p92 = scmp.eq.s32.totalorder %s24, 0
      %p93 = por %p91, %p92
      %s95 = sadd.s32 %s94, 1
      %p98 = scmp.eq.s32.totalorder %s18, 1
      %p99 = scmp.ne.s32.totalorder %s94, %s96
      %p100 = scmp.eq.s32.totalorder %s18, 0
      %p101 = por %p99, %p100
      %p102 = scmp.ne.s32.totalorder %s94, %s96
      %p103 = scmp.eq.s32.totalorder %s23, 1
      %p104 = por %p102, %p103
      %p105 = scmp.ne.s32.totalorder %s96, %s97
      %p106 = scmp.eq.s32.totalorder %s23, 0
      %p107 = por %p105, %p106
      %p108 = scmp.ne.s32.totalorder %s96, %s97
      %p109 = scmp.eq.s32.totalorder %s24, 1
      %p110 = por %p108, %p109
      %p112 = scmp.ne.s32.totalorder %s97, %s111
      %p113 = scmp.eq.s32.totalorder %s24, 0
      %p114 = por %p112, %p113
      %s115 = ssub.s32 %s18, %s25
      %p116 = scmp.eq.s32.totalorder %s115, 0
      %s118 = sadd.s32 %s117, 1
      %s119 = scalar_select %p116, %s117, %s118
      %p122 = pneg %p116
      %p123 = scmp.eq.s32.totalorder %s18, 1
      %p124 = por %p122, %p123
      %p125 = scmp.ne.s32.totalorder %s117, %s120
      %p126 = scmp.eq.s32.totalorder %s18, 0
      %p127 = por %p125, %p126
      %p128 = scmp.ne.s32.totalorder %s117, %s120
      %p129 = scmp.eq.s32.totalorder %s23, 1
      %p130 = por %p128, %p129
      %p131 = scmp.ne.s32.totalorder %s120, %s121
      %p132 = scmp.eq.s32.totalorder %s23, 0
      %p133 = por %p131, %p132
      %p134 = scmp.ne.s32.totalorder %s120, %s121
      %p135 = scmp.eq.s32.totalorder %s24, 1
      %p136 = por %p134, %p135
      %p138 = scmp.ne.s32.totalorder %s121, %s137
      %p139 = scmp.eq.s32.totalorder %s24, 0
      %p140 = por %p138, %p139
      %p141 = scmp.le.s32.totalorder 1, %s18
      %p142 = scmp.lt.s32.totalorder %s18, 3
      %p143 = pnand %p141, %p142
      %p144 = pneg %p143
      // Predicated region
      $region9: #{run.1} parent=5 // pred_check
        _
      $region10: #{run.1} parent=5 // pred_check_branch
        %146 = sbr.rel (%p143) target = $region12
      $region11: #{run.1} parent=5 // pred_region
        %s147 = ssub.s32 %s18, 1
        // Predicated region
        $region13: #{run.1} parent=11 // pred_check
          %p148 = pneg %p65
        $region14: #{run.1} parent=11 // pred_check_branch
          %150 = sbr.rel (%p148) target = $region16
        $region15: #{run.1} parent=11 // pred_region
          %152 = vsyncadd [#allocation6], 0
          %s153 = sshll.u32 %s1, 4
          %s154 = int_to_ptr.hbm [resolvable:$true] %s153
          %s155 = sshll.u32 [#allocation5], 4
          %s156 = int_to_ptr.vmem [resolvable:$true] %s155
          %161 = dma.hbm_to_vmem [thread:$0]  %s154, 1536, %s156, [#allocation6], 128, 128, 8
        $region16: #{run.1} parent=11 // pred_fallthru
          _
        // Predicated region
        $region17: #{run.1} parent=11 // pred_check
          %p162 = pneg %p86
        $region18: #{run.1} parent=11 // pred_check_branch
          %164 = sbr.rel (%p162) target = $region20
        $region19: #{run.1} parent=11 // pred_region
          %166 = vsyncadd [#allocation6], 0
          %s167 = sshll.u32 %s2, 4
          %s168 = int_to_ptr.hbm [resolvable:$true] %s167
          %s169 = sshll.u32 [#allocation7], 4
          %s170 = int_to_ptr.vmem [resolvable:$true] %s169
          %175 = dma.hbm_to_vmem [thread:$0]  %s168, 384, %s170, [#allocation6], 128, 128, 8
        $region20: #{run.1} parent=11 // pred_fallthru
          _
        // Predicated region
        $region21: #{run.1} parent=11 // pred_check
          %p176 = pneg %p107
        $region22: #{run.1} parent=11 // pred_check_branch
          %178 = sbr.rel (%p176) target = $region24
        $region23: #{run.1} parent=11 // pred_region
          %180 = vsyncadd [#allocation9], 0
          %s181 = sshll.u32 %s3, 4
          %s182 = int_to_ptr.hbm [resolvable:$true] %s181
          %s183 = sshll.u32 [#allocation8], 4
          %s184 = int_to_ptr.vmem [resolvable:$true] %s183
          %189 = dma.hbm_to_vmem [thread:$0]  %s182, 1536, %s184, [#allocation9], 128, 128, 8
        $region24: #{run.1} parent=11 // pred_fallthru
          _
      $region12: #{run.1} parent=5 // pred_fallthru
        _
      %p190 = scmp.lt.s32.totalorder %s18, 2
      // Predicated region
      $region25: #{run.1} parent=5 // pred_check
        %p191 = pneg %p190
      $region26: #{run.1} parent=5 // pred_check_branch
        %193 = sbr.rel (%p191) target = $region28
      $region27: #{run.1} parent=5 // pred_region
        // Predicated region
        $region29: #{run.1} parent=27 // pred_check
          %p194 = pneg %p38
        $region30: #{run.1} parent=27 // pred_check_branch
          %196 = sbr.rel (%p194) target = $region32
        $region31: #{run.1} parent=27 // pred_region
          %s197 = sand.u32 %s28, 1
          %s198 = scalar_lea.sflag [#allocation3], %s197
          %s199 = sand.u32 %s28, 1
          %s200 = smul.addr %s199, 48
          %s201 = scalar_lea.vmem [#allocation2], %s200
          %203 = vsyncadd %s198, 0
          %s204 = smul.addr %s18, 6
          %s205 = smul.addr %s204, 8
          %s206 = scalar_lea.hbm %s0, %s205
          %s207 = sshll.u32 %s206, 4
          %s208 = int_to_ptr.hbm [resolvable:$true] %s207
          %s209 = sshll.u32 %s201, 4
          %s210 = int_to_ptr.vmem [resolvable:$true] %s209
          %215 = dma.hbm_to_vmem [thread:$0]  %s208, 768, %s210, %s198, 128, 128, 8
        $region32: #{run.1} parent=27 // pred_fallthru
          _
      $region28: #{run.1} parent=5 // pred_fallthru
        _
      %p216 = scmp.le.s32.totalorder 1, %s18
      %p217 = scmp.lt.s32.totalorder %s18, 3
      %p218 = pnand %p216, %p217
      %p219 = pneg %p218
      // Predicated region
      $region33: #{run.1} parent=5 // pred_check
        _
      $region34: #{run.1} parent=5 // pred_check_branch
        %221 = sbr.rel (%p218) target = $region36
      $region35: #{run.1} parent=5 // pred_region
        %s222 = ssub.s32 %s18, 1
        %s223 = sand.u32 %s31, 1
        %s224 = scalar_lea.sflag [#allocation3], %s223
        %s225 = sand.u32 %s31, 1
        %s226 = smul.addr %s225, 48
        %s227 = scalar_lea.vmem [#allocation2], %s226
        // Predicated region
        $region37: #{run.1} parent=35 // pred_check
          %p228 = pneg %p44
        $region38: #{run.1} parent=35 // pred_check_branch
          %230 = sbr.rel (%p228) target = $region40
        $region39: #{run.1} parent=35 // pred_region
          %232 = dma.done %s224, 768
        $region40: #{run.1} parent=35 // pred_fallthru
          _
        // Predicated region
        $region41: #{run.1} parent=35 // pred_check
          %p233 = pneg %p65
        $region42: #{run.1} parent=35 // pred_check_branch
          %235 = sbr.rel (%p233) target = $region44
        $region43: #{run.1} parent=35 // pred_region
          %237 = dma.done [#allocation6], 1536
        $region44: #{run.1} parent=35 // pred_fallthru
          _
        // Predicated region
        $region45: #{run.1} parent=35 // pred_check
          %p238 = pneg %p86
        $region46: #{run.1} parent=35 // pred_check_branch
          %240 = sbr.rel (%p238) target = $region48
        $region47: #{run.1} parent=35 // pred_region
          %242 = dma.done [#allocation6], 384
        $region48: #{run.1} parent=35 // pred_fallthru
          _
        // Predicated region
        $region49: #{run.1} parent=35 // pred_check
          %p243 = pneg %p107
        $region50: #{run.1} parent=35 // pred_check_branch
          %245 = sbr.rel (%p243) target = $region52
        $region51: #{run.1} parent=35 // pred_region
          %247 = dma.done [#allocation9], 1536
        $region52: #{run.1} parent=35 // pred_fallthru
          _
        %s248 = sand.u32 %s31, 1
        %s249 = scalar_lea.sflag [#allocation3], %s248
        %s250 = sand.u32 %s31, 1
        %s251 = smul.addr %s250, 48
        %s252 = scalar_lea.vmem [#allocation2], %s251
        %p253 = pneg %p44
        %p254 = pneg %p41
        %p255 = pneg %p65
        %p256 = pneg %p62
        %p257 = pneg %p86
        %p258 = pneg %p83
        %p259 = pneg %p107
        %p260 = pneg %p104
        %p261 = pneg %p133
        %p262 = pneg %p130
        %s263 = sand.u32 %s120, 1
        %s264 = scalar_lea.sflag [#allocation4], %s263
        %s265 = sand.u32 %s120, 1
        %s266 = smul.addr %s265, 96
        %s267 = scalar_lea.vmem [#allocation10], %s266
        %v268 = vld [vmem:[%s227] sm:$0xff]
        %v269 = vld [vmem:[%s227 + $0x8] sm:$0xff]
        %v270 = vld [vmem:[%s227 + $0x10] sm:$0xff]
        %v271 = vld [vmem:[%s227 + $0x18] sm:$0xff]
        %v272 = vld [vmem:[%s227 + $0x20] sm:$0xff]
        %v273 = vld [vmem:[%s227 + $0x28] sm:$0xff]
        %v274 = vld [vmem:[#allocation7] sm:$0xff]
        %v275 = vld [vmem:[#allocation7 + $0x8] sm:$0xff]
        %v276 = vld [vmem:[#allocation7 + $0x10] sm:$0xff]
        %vm277 = vcmask 195584
        %v279 = vsel %vm277, %v268, 0
        %v282 = vsel %vm277, %v269, 0
        %v285 = vsel %vm277, %v270, 0
        %v288 = vsel %vm277, %v271, 0
        %v291 = vsel %vm277, %v272, 0
        %v294 = vsel %vm277, %v273, 0
        %296 = vmatpush.msra.mxu0 0.0
        %297 = vmatpush.msra.mxu0 0.0
        %298 = vmatpush.msra.mxu0 0.0
        %299 = vmatpush.msra.mxu0 0.0
        %300 = vmatpush.msra.mxu0 0.0
        %301 = vmatpush.msra.mxu0 0.0
        %302 = vmatpush.msra.mxu0 0.0
        %303 = vmatpush.msra.mxu0 0.0
        %304 = vmatpush.msra.mxu0 0.0
        %305 = vmatpush.msra.mxu0 0.0
        %306 = vmatpush.msra.mxu0 0.0
        %307 = vmatpush.msra.mxu0 0.0
        %308 = vmatpush.msra.mxu0 0.0
        %309 = vmatpush.msra.mxu0 %v276
        %310 = vmatpush.msra.mxu0 %v275
        %311 = vmatpush.msra.mxu0 %v274
        %312 = vmatmul.f32.gmra.mxu0 %v279
        %v313 = vpop.f32.mrf.mxu0
        %v314 = vadd.f32 0.0, %v313
        %315 = vmatmul.f32.gmra.mxu0 %v282
        %v316 = vpop.f32.mrf.mxu0
        %v317 = vadd.f32 0.0, %v316
        %318 = vmatmul.f32.gmra.mxu0 %v285
        %v319 = vpop.f32.mrf.mxu0
        %v320 = vadd.f32 0.0, %v319
        %321 = vmatmul.f32.gmra.mxu0 %v288
        %v322 = vpop.f32.mrf.mxu0
        %v323 = vadd.f32 0.0, %v322
        %324 = vmatmul.f32.gmra.mxu0 %v291
        %v325 = vpop.f32.mrf.mxu0
        %v326 = vadd.f32 0.0, %v325
        %327 = vmatmul.f32.gmra.mxu0 %v294
        %v328 = vpop.f32.mrf.mxu0
        %v329 = vadd.f32 0.0, %v328
        %330 = vdwg.mxu0
        %v331 = vld [vmem:[#allocation5] sm:$0xff]
        %v332 = vld [vmem:[#allocation5 + $0x8] sm:$0xff]
        %v333 = vld [vmem:[#allocation5 + $0x10] sm:$0xff]
        %v334 = vld [vmem:[#allocation5 + $0x18] sm:$0xff]
        %v335 = vld [vmem:[#allocation5 + $0x20] sm:$0xff]
        %v336 = vld [vmem:[#allocation5 + $0x28] sm:$0xff]
        %v337 = vld [vmem:[#allocation5 + $0x30] sm:$0xff]
        %v338 = vld [vmem:[#allocation5 + $0x38] sm:$0xff]
        %v339 = vld [vmem:[#allocation5 + $0x40] sm:$0xff]
        %v340 = vld [vmem:[#allocation5 + $0x48] sm:$0xff]
        %v341 = vld [vmem:[#allocation5 + $0x50] sm:$0xff]
        %v342 = vld [vmem:[#allocation5 + $0x58] sm:$0xff]
        %v343 = vld [vmem:[#allocation8] sm:$0xff]
        %v344 = vld [vmem:[#allocation8 + $0x8] sm:$0xff]
        %v345 = vld [vmem:[#allocation8 + $0x10] sm:$0xff]
        %v346 = vld [vmem:[#allocation8 + $0x18] sm:$0xff]
        %v347 = vld [vmem:[#allocation8 + $0x20] sm:$0xff]
        %v348 = vld [vmem:[#allocation8 + $0x28] sm:$0xff]
        %v349 = vld [vmem:[#allocation8 + $0x30] sm:$0xff]
        %v350 = vld [vmem:[#allocation8 + $0x38] sm:$0xff]
        %v351 = vld [vmem:[#allocation8 + $0x40] sm:$0xff]
        %v352 = vld [vmem:[#allocation8 + $0x48] sm:$0xff]
        %v353 = vld [vmem:[#allocation8 + $0x50] sm:$0xff]
        %v354 = vld [vmem:[#allocation8 + $0x58] sm:$0xff]
        %vm355 = vcmask 392192
        %v357 = vsel %vm355, %v331, 0
        %v360 = vsel %vm355, %v332, 0
        %v363 = vsel %vm355, %v333, 0
        %v366 = vsel %vm355, %v334, 0
        %v369 = vsel %vm355, %v335, 0
        %v372 = vsel %vm355, %v336, 0
        %v375 = vsel %vm355, %v337, 0
        %v378 = vsel %vm355, %v338, 0
        %v381 = vsel %vm355, %v339, 0
        %v384 = vsel %vm355, %v340, 0
        %v387 = vsel %vm355, %v341, 0
        %v390 = vsel %vm355, %v342, 0
        %392 = vmatpush.msra.mxu0 0.0
        %393 = vmatpush.msra.mxu0 0.0
        %394 = vmatpush.msra.mxu0 0.0
        %395 = vmatpush.msra.mxu0 0.0
        %396 = vmatpush.msra.mxu0 0.0
        %397 = vmatpush.msra.mxu0 0.0
        %398 = vmatpush.msra.mxu0 0.0
        %399 = vmatpush.msra.mxu0 0.0
        %400 = vmatpush.msra.mxu0 0.0
        %401 = vmatpush.msra.mxu0 0.0
        %402 = vmatpush.msra.mxu0 %v329
        %403 = vmatpush.msra.mxu0 %v326
        %404 = vmatpush.msra.mxu0 %v323
        %405 = vmatpush.msra.mxu0 %v320
        %406 = vmatpush.msra.mxu0 %v317
        %407 = vmatpush.msra.mxu0 %v314
        %408 = vmatmul.f32.gmra.mxu0 %v357
        %v409 = vpop.f32.mrf.mxu0
        %v410 = vadd.f32 %v343, %v409
        %411 = vmatmul.f32.gmra.mxu0 %v360
        %v412 = vpop.f32.mrf.mxu0
        %v413 = vadd.f32 %v344, %v412
        %414 = vmatmul.f32.gmra.mxu0 %v363
        %v415 = vpop.f32.mrf.mxu0
        %v416 = vadd.f32 %v345, %v415
        %417 = vmatmul.f32.gmra.mxu0 %v366
        %v418 = vpop.f32.mrf.mxu0
        %v419 = vadd.f32 %v346, %v418
        %420 = vmatmul.f32.gmra.mxu0 %v369
        %v421 = vpop.f32.mrf.mxu0
        %v422 = vadd.f32 %v347, %v421
        %423 = vmatmul.f32.gmra.mxu0 %v372
        %v424 = vpop.f32.mrf.mxu0
        %v425 = vadd.f32 %v348, %v424
        %426 = vmatmul.f32.gmra.mxu0 %v375
        %v427 = vpop.f32.mrf.mxu0
        %v428 = vadd.f32 %v349, %v427
        %429 = vmatmul.f32.gmra.mxu0 %v378
        %v430 = vpop.f32.mrf.mxu0
        %v431 = vadd.f32 %v350, %v430
        %432 = vmatmul.f32.gmra.mxu0 %v381
        %v433 = vpop.f32.mrf.mxu0
        %v434 = vadd.f32 %v351, %v433
        %435 = vmatmul.f32.gmra.mxu0 %v384
        %v436 = vpop.f32.mrf.mxu0
        %v437 = vadd.f32 %v352, %v436
        %438 = vmatmul.f32.gmra.mxu0 %v387
        %v439 = vpop.f32.mrf.mxu0
        %v440 = vadd.f32 %v353, %v439
        %441 = vmatmul.f32.gmra.mxu0 %v390
        %v442 = vpop.f32.mrf.mxu0
        %v443 = vadd.f32 %v354, %v442
        %444 = vdwg.mxu0
        %vm445 = vcmask 261120
        %446 = vst.msk [vmem:[%s267] sm:$0xff] %vm445, %v410
        %447 = vst.msk [vmem:[%s267 + $0x8] sm:$0xff] %vm445, %v413
        %448 = vst.msk [vmem:[%s267 + $0x10] sm:$0xff] %vm445, %v416
        %449 = vst.msk [vmem:[%s267 + $0x18] sm:$0xff] %vm445, %v419
        %450 = vst.msk [vmem:[%s267 + $0x20] sm:$0xff] %vm445, %v422
        %451 = vst.msk [vmem:[%s267 + $0x28] sm:$0xff] %vm445, %v425
        %452 = vst.msk [vmem:[%s267 + $0x30] sm:$0xff] %vm445, %v428
        %453 = vst.msk [vmem:[%s267 + $0x38] sm:$0xff] %vm445, %v431
        %454 = vst.msk [vmem:[%s267 + $0x40] sm:$0xff] %vm445, %v434
        %455 = vst.msk [vmem:[%s267 + $0x48] sm:$0xff] %vm445, %v437
        %456 = vst.msk [vmem:[%s267 + $0x50] sm:$0xff] %vm445, %v440
        %457 = vst.msk [vmem:[%s267 + $0x58] sm:$0xff] %vm445, %v443
        %s458 = sand.u32 %s120, 1
        %s459 = scalar_lea.sflag [#allocation4], %s458
        %s460 = sand.u32 %s120, 1
        %s461 = smul.addr %s460, 96
        %s462 = scalar_lea.vmem [#allocation10], %s461
        // Predicated region
        $region53: #{run.1} parent=35 // pred_check
          %p463 = pneg %p130
        $region54: #{run.1} parent=35 // pred_check_branch
          %465 = sbr.rel (%p463) target = $region56
        $region55: #{run.1} parent=35 // pred_region
          %467 = vsyncadd %s459, 0
          %s468 = smul.addr %s23, 12
          %s469 = smul.addr %s468, 8
          %s470 = scalar_lea.hbm %s4, %s469
          %s471 = sshll.u32 %s462, 4
          %s472 = int_to_ptr.vmem [resolvable:$true] %s471
          %s473 = sshll.u32 %s470, 4
          %s474 = int_to_ptr.hbm [resolvable:$true] %s473
          %479 = dma.vmem_to_hbm [thread:$0]  %s472, 1536, %s474, %s459, 128, 128, 8
        $region56: #{run.1} parent=35 // pred_fallthru
          _
      $region36: #{run.1} parent=5 // pred_fallthru
        _
      %p480 = scmp.le.s32.totalorder 2, %s18
      // Predicated region
      $region57: #{run.1} parent=5 // pred_check
        %p481 = pneg %p480
      $region58: #{run.1} parent=5 // pred_check_branch
        %483 = sbr.rel (%p481) target = $region60
      $region59: #{run.1} parent=5 // pred_region
        %s484 = ssub.s32 %s18, 2
        // Predicated region
        $region61: #{run.1} parent=59 // pred_check
          %p485 = pneg %p136
        $region62: #{run.1} parent=59 // pred_check_branch
          %487 = sbr.rel (%p485) target = $region64
        $region63: #{run.1} parent=59 // pred_region
          %s488 = sand.u32 %s121, 1
          %s489 = scalar_lea.sflag [#allocation4], %s488
          %s490 = sand.u32 %s121, 1
          %s491 = smul.addr %s490, 96
          %s492 = scalar_lea.vmem [#allocation10], %s491
          %494 = dma.done %s489, 1536
        $region64: #{run.1} parent=59 // pred_fallthru
          _
      $region60: #{run.1} parent=5 // pred_fallthru
        _
    $region6: #{run.1} parent=1 // loop_footer
      %s22 = sadd.s32 1, %s18
    $region7: #{run.1} parent=1 // loop_footer_branch
      %17 = sbr.rel target = $region3
    $region8: #{run.1} parent=1 // loop_exit
      _
    %495 = vsyncpa [#allocation3], 1
    %s496 = scalar_lea.sflag [#allocation3], 1
    %497 = vsyncpa %s496, 1
    %498 = vsyncpa [#allocation6], 1
    %499 = vsyncpa [#allocation9], 1
    %500 = vsyncpa [#allocation4], 1
    %s501 = scalar_lea.sflag [#allocation4], 1
    %502 = vsyncpa %s501, 1

</llo_original>
